<compile_context>
chip_gen: v7x
topology: tpu7x:2x2x1
jax: 0.10.0
libtpu: 0.0.40
codegen_flags: <defaults>
</compile_context>

<pallas_src>
import functools

import jax
import jax.numpy as jnp
from jax import lax
from jax.experimental import pallas as pl
from jax.experimental.pallas import tpu as pltpu


def _round_up(x, m):
    return (x + m - 1) // m * m


def _polyloss_kernel(w_ref, logits_ref, labels_ref, out_ref, *,
                     epsilon, n_valid, tile_b):
    # logits_ref: (2, TILE_B) — classes on sublanes, batch on lanes.
    x0 = logits_ref[0:1, :].astype(jnp.float32)      # (1, T) class-0 logits
    x1 = logits_ref[1:2, :].astype(jnp.float32)      # (1, T) class-1 logits
    lab = labels_ref[...]                            # (1, T) int32
    is1 = lab == 1

    # numerically-stable log-softmax over C=2, purely elementwise (VPU + EUP)
    m = jnp.maximum(x0, x1)
    e0 = jnp.exp(x0 - m)
    e1 = jnp.exp(x1 - m)
    log_denom = jnp.log(e0 + e1)

    x_true = jnp.where(is1, x1, x0)                  # logit of the true class
    logp_true = (x_true - m) - log_denom             # log p(true class)
    pt = jnp.exp(logp_true)                          # == one_hot · softmax

    w_s = jnp.where(is1, w_ref[1], w_ref[0])         # per-sample class weight (SMEM scalars)
    ce = -w_s * logp_true                            # weighted CE, reduction='none'
    poly1 = ce + epsilon * (1.0 - pt)                # (1, T)

    # zero out lanes that are batch padding so the wrapper sum is exact
    col = pl.program_id(0) * tile_b + lax.broadcasted_iota(jnp.int32, poly1.shape, 1)
    out_ref[...] = jnp.where(col < n_valid, poly1, 0.0)


def poly_loss(predicted, labels, weight_loss, epsilon=1.0, max_tile_b=32768):
    """predicted: (B, 2) float (any dtype), labels: (B,) int, weight_loss: (2,) float."""
    B, C = predicted.shape
    assert C == 2, "PolyLoss kernel is specialized for 2 classes"

    # Lane-dense layout: batch on the last (lane) axis, padded to a tile multiple.
    b_pad = _round_up(B, 128)
    tile_b = min(max_tile_b, b_pad)
    b_pad = _round_up(b_pad, tile_b)
    grid = (b_pad // tile_b,)

    logits_t = jnp.pad(jnp.transpose(predicted), ((0, 0), (0, b_pad - B)))   # (2, B_pad), native dtype
    labels2d = jnp.pad(labels.astype(jnp.int32), (0, b_pad - B)).reshape(1, b_pad)

    kernel = functools.partial(_polyloss_kernel, epsilon=float(epsilon),
                               n_valid=B, tile_b=tile_b)

    out = pl.pallas_call(
        kernel,
        out_shape=jax.ShapeDtypeStruct((1, b_pad), jnp.float32),
        grid_spec=pltpu.PrefetchScalarGridSpec(
            num_scalar_prefetch=0,
            grid=grid,
            in_specs=[
                pl.BlockSpec(memory_space=pltpu.MemorySpace.SMEM),        # (2,) class weights
                pl.BlockSpec((2, tile_b), lambda i: (0, i)),               # transposed logits
                pl.BlockSpec((1, tile_b), lambda i: (0, i)),               # labels
            ],
            out_specs=pl.BlockSpec((1, tile_b), lambda i: (0, i)),         # per-sample poly1
        ),
        compiler_params=pltpu.CompilerParams(
            dimension_semantics=("parallel",)),                            # both TCs on v7x
    )(weight_loss.astype(jnp.float32), logits_t, labels2d)

    # Finish the mean over the true batch size (padded lanes contribute 0).
    return jnp.sum(out) * (1.0 / B)


def _poly_loss_ref(predicted, labels, weight_loss, epsilon=1.0):
    """Pure-JAX reference mirroring the PyTorch forward."""
    B, C = predicted.shape
    one_hot = jax.nn.one_hot(labels, C, dtype=jnp.float32)
    sm = jax.nn.softmax(predicted.astype(jnp.float32), axis=1)
    pt = jnp.sum(one_hot * sm, axis=-1)
    logsm = jax.nn.log_softmax(predicted.astype(jnp.float32), axis=1)
    ce = -weight_loss[labels] * jnp.take_along_axis(
        logsm, labels[:, None], axis=1)[:, 0]
    poly1 = ce + epsilon * (1.0 - pt)
    return jnp.mean(poly1)


if __name__ == "__main__":
    key = jax.random.PRNGKey(0)
    k_pred, k_lab = jax.random.split(key)

    batch_size = 8
    num_classes = 2
    epsilon = 1.0

    predicted = jax.random.normal(k_pred, (batch_size, num_classes), dtype=jnp.float32)
    labels = jax.random.randint(k_lab, (batch_size,), 0, num_classes, dtype=jnp.int32)
    # Deterministic class weights (the weight_loss tensor from __init__).
    weight_loss = jnp.array([1.0, 2.0], dtype=jnp.float32)

    loss = poly_loss(predicted, labels, weight_loss, epsilon)
    loss = jax.block_until_ready(loss)

    ref = _poly_loss_ref(predicted, labels, weight_loss, epsilon)
    assert jnp.allclose(loss, ref, atol=1e-5, rtol=1e-5), (loss, ref)

    print("KERNEL_OK")
</pallas_src>

<mosaic_0001>
module attributes {stable_mosaic.version = 11 : i64} {
  func.func @_polyloss_kernel(%arg0: i32, %arg1: memref<2xf32, #tpu.memory_space<smem>>, %arg2: memref<2x128xf32, #tpu.memory_space<vmem>>, %arg3: memref<1x128xi32, #tpu.memory_space<vmem>>, %arg4: memref<1x128xf32, #tpu.memory_space<vmem>>) attributes {dimension_semantics = [#tpu.dimension_semantics<parallel>], iteration_bounds = array<i64: 1>, scalar_prefetch = 0 : i64, scratch_operands = 0 : i64, tpu.core_type = #tpu.core_type<tc>, window_params = [{transform_indices = @transform_0, window_bounds = array<i64: 2>}, {transform_indices = @transform_1, window_bounds = array<i64: 2, 128>}, {transform_indices = @transform_2, window_bounds = array<i64: 1, 128>}, {transform_indices = @transform_3, window_bounds = array<i64: 1, 128>}]} {
    %c0 = arith.constant 0 : index
    %c0_0 = arith.constant 0 : index
    %0 = vector.load %arg2[%c0, %c0_0] : memref<2x128xf32, #tpu.memory_space<vmem>>, vector<1x128xf32>
    %c1 = arith.constant 1 : index
    %c0_1 = arith.constant 0 : index
    %1 = vector.load %arg2[%c1, %c0_1] : memref<2x128xf32, #tpu.memory_space<vmem>>, vector<1x128xf32>
    %c0_2 = arith.constant 0 : index
    %c0_3 = arith.constant 0 : index
    %2 = vector.load %arg3[%c0_2, %c0_3] : memref<1x128xi32, #tpu.memory_space<vmem>>, vector<1x128xi32>
    %c1_i32 = arith.constant 1 : i32
    %3 = vector.broadcast %c1_i32 : i32 to vector<1x128xi32>
    %4 = arith.cmpi eq, %2, %3 : vector<1x128xi32>
    %5 = arith.maximumf %0, %1 : vector<1x128xf32>
    %6 = arith.subf %0, %5 : vector<1x128xf32>
    %7 = math.exp %6 : vector<1x128xf32>
    %8 = arith.subf %1, %5 : vector<1x128xf32>
    %9 = math.exp %8 : vector<1x128xf32>
    %10 = arith.addf %7, %9 : vector<1x128xf32>
    %11 = math.log %10 : vector<1x128xf32>
    %12 = arith.select %4, %1, %0 : vector<1x128xi1>, vector<1x128xf32>
    %13 = arith.subf %12, %5 : vector<1x128xf32>
    %14 = arith.subf %13, %11 : vector<1x128xf32>
    %15 = math.exp %14 : vector<1x128xf32>
    %c1_4 = arith.constant 1 : index
    %16 = memref.load %arg1[%c1_4] : memref<2xf32, #tpu.memory_space<smem>>
    %c0_5 = arith.constant 0 : index
    %17 = memref.load %arg1[%c0_5] : memref<2xf32, #tpu.memory_space<smem>>
    %18 = vector.broadcast %16 : f32 to vector<1x128xf32>
    %19 = vector.broadcast %17 : f32 to vector<1x128xf32>
    %20 = arith.select %4, %18, %19 : vector<1x128xi1>, vector<1x128xf32>
    %cst = arith.constant 0.000000e+00 : f32
    %21 = vector.broadcast %cst : f32 to vector<1x128xf32>
    %22 = arith.subf %21, %20 : vector<1x128xf32>
    %23 = arith.mulf %22, %14 : vector<1x128xf32>
    %cst_6 = arith.constant 1.000000e+00 : f32
    %24 = vector.broadcast %cst_6 : f32 to vector<1x128xf32>
    %25 = arith.subf %24, %15 : vector<1x128xf32>
    %cst_7 = arith.constant 1.000000e+00 : f32
    %26 = vector.broadcast %cst_7 : f32 to vector<1x128xf32>
    %27 = arith.mulf %26, %25 : vector<1x128xf32>
    %28 = arith.addf %23, %27 : vector<1x128xf32>
    %c128_i32 = arith.constant 128 : i32
    %29 = arith.muli %arg0, %c128_i32 : i32
    %30 = tpu.iota {dimensions = array<i32: 1>} : vector<1x128xi32>
    %31 = vector.broadcast %29 : i32 to vector<1x128xi32>
    %32 = arith.addi %31, %30 : vector<1x128xi32>
    %c8_i32 = arith.constant 8 : i32
    %33 = vector.broadcast %c8_i32 : i32 to vector<1x128xi32>
    %34 = arith.cmpi slt, %32, %33 : vector<1x128xi32>
    %cst_8 = arith.constant 0.000000e+00 : f32
    %35 = vector.broadcast %cst_8 : f32 to vector<1x128xf32>
    %36 = arith.select %34, %28, %35 : vector<1x128xi1>, vector<1x128xf32>
    %c0_9 = arith.constant 0 : index
    %c0_10 = arith.constant 0 : index
    %37 = vector.load %arg4[%c0_9, %c0_10] : memref<1x128xf32, #tpu.memory_space<vmem>>, vector<1x128xf32>
    tpu.vector_store %arg4[%c0_9, %c0_10], %36 {strides = array<i32>} : memref<1x128xf32, #tpu.memory_space<vmem>>, vector<1x128xf32>,
    return
  }
  func.func @transform_0(%arg0: i32) -> i32 {
    %c0_i32 = arith.constant 0 : i32
    %c0_i32_0 = arith.constant 0 : i32
    return %c0_i32 : i32
  }
  func.func @transform_1(%arg0: i32) -> (i32, i32) {
    %c0_i32 = arith.constant 0 : i32
    %c0_i32_0 = arith.constant 0 : i32
    return %c0_i32, %arg0 : i32, i32
  }
  func.func @transform_2(%arg0: i32) -> (i32, i32) {
    %c0_i32 = arith.constant 0 : i32
    %c0_i32_0 = arith.constant 0 : i32
    return %c0_i32, %arg0 : i32, i32
  }
  func.func @transform_3(%arg0: i32) -> (i32, i32) {
    %c0_i32 = arith.constant 0 : i32
    %c0_i32_0 = arith.constant 0 : i32
    return %c0_i32, %arg0 : i32, i32
  }
}

</mosaic_0001>

<llo_original>
// kernel: tpu_custom_call.1
$region0: #{tpu_custom_call.1}
  #allocation0 [shape = 'u32[]', space=smem, size = 0x4, offset = 0x4, fixed_abs, tag = 'smem constant byte address 0x4 - core index']
  #allocation1 [shape = 'u32[144,128]{1,0:T(1,128)}', space=vmem, size = 0x12000, scoped, tag = 'internal scratch']
  %s0 = inlined_call_operand.hbm [shape: f32[2], index: 0, kind: input, shape index: {}]
  %s1 = inlined_call_operand.vmem [shape: f32[2,128], index: 1, kind: input, shape index: {}]
  %s2 = inlined_call_operand.vmem [shape: s32[1,128], index: 2, kind: input, shape index: {}]
  %s3 = inlined_call_operand.hbm [shape: f32[1,128], index: 3, kind: output, shape index: {}]
  %s4 = sld [smem:[#allocation0]]
  $region26: #{tpu_custom_call.1} parent=0
    _
  %s6 = ssub.s32 1, %s4
  %s7 = scalar_select 0, %s6, %s4
  $region1: #{tpu_custom_call.1} parent=0
    #allocation2 [shape = 'u8[512]{0}', space=smem, size = 0x200, scoped, tag = 'input window, operand 0, single buffered']
    #allocation3 [shape = 's32[1]{0}', space=sflag, size = 0x4, scoped, tag = 'scoped memory for tpu_custom_call.1']
    #allocation4 [shape = 's32[1]{0}', space=sflag, size = 0x4, scoped, tag = 'scoped memory for tpu_custom_call.1']
    #allocation5 [shape = 'u8[512]{0}', space=vmem, size = 0x400, scoped, tag = 'output window, operand 0, single buffered']
    %8 = vsyncpa [#allocation4], 0
    %9 = vsyncpa [#allocation3], 0
    // Predicated region
    $region2: #{tpu_custom_call.1} parent=1 // pred_check
      _
    $region3: #{tpu_custom_call.1} parent=1 // pred_check_branch
      %11 = sbr.rel (0) target = $region5
    $region4: #{tpu_custom_call.1} parent=1 // pred_region
      %s13 = ssub.s32 16, 16
      %14 = vsyncadd [#allocation4], %s13
      %17 = dma.hbm_to_smem %s0, 16, [#allocation2], [#allocation4]
    $region5: #{tpu_custom_call.1} parent=1 // pred_fallthru
      _
    // Predicated region
    $region6: #{tpu_custom_call.1} parent=1 // pred_check
      _
    $region7: #{tpu_custom_call.1} parent=1 // pred_check_branch
      %19 = sbr.rel (0) target = $region9
    $region8: #{tpu_custom_call.1} parent=1 // pred_region
      _
    $region9: #{tpu_custom_call.1} parent=1 // pred_fallthru
      _
    // Predicated region
    $region10: #{tpu_custom_call.1} parent=1 // pred_check
      _
    $region11: #{tpu_custom_call.1} parent=1 // pred_check_branch
      %21 = sbr.rel (0) target = $region13
    $region12: #{tpu_custom_call.1} parent=1 // pred_region
      _
    $region13: #{tpu_custom_call.1} parent=1 // pred_fallthru
      _
    // Predicated region
    $region14: #{tpu_custom_call.1} parent=1 // pred_check
      _
    $region15: #{tpu_custom_call.1} parent=1 // pred_check_branch
      %23 = sbr.rel (0) target = $region17
    $region16: #{tpu_custom_call.1} parent=1 // pred_region
      %24 = dma.done [#allocation4], 16
    $region17: #{tpu_custom_call.1} parent=1 // pred_fallthru
      _
    %25 = sfence
    %v26 = vld [vmem:[%s1] sm:$0x1]
    %v27 = vld [vmem:[%s1 + $0x1] sm:$0x1]
    %v28 = vld [vmem:[%s2] sm:$0x1]
    %vm29 = vcmp.eq.s32.totalorder %v28, 1
    %v30 = vmax.f32 %v26, %v27
    %v31 = vsub.f32 %v26, %v30
    %v32 = vmul.f32 %v31, 1.442695
    %v33 = vpow.pop %v32
    %v34 = vsub.f32 %v27, %v30
    %v35 = vmul.f32 %v34, 1.442695
    %v36 = vpow.pop %v35
    %v37 = vadd.f32 %v33, %v36
    %v38 = vlog2.pop %v37
    %v39 = vmul.f32 %v38, 0.6931472
    %v40 = vsel %vm29, %v27, %v26
    %v41 = vsub.f32 %v40, %v30
    %v42 = vsub.f32 %v41, %v39
    %v43 = vmul.f32 %v42, 1.442695
    %v44 = vpow.pop %v43
    %s45 = sld [smem:[#allocation2 + $0x1]]
    %s46 = sld [smem:[#allocation2]]
    %v47 = vstv %s45
    %v48 = vstv %s46
    %v49 = vsel %vm29, %v47, %v48
    %v50 = vsub.f32 0.0, %v49
    %v51 = vmul.f32 %v50, %v42
    %v52 = vsub.f32 1.0, %v44
    %v53 = vadd.f32 %v51, %v52
    %s54 = smul.u32 0, 128
    %v55 = vlaneseq
    %v56 = vand.u32 %v55, 127
    %v57 = vstv %s54
    %v58 = vadd.s32 %v57, %v56
    %vm59 = vcmp.lt.s32.totalorder %v58, 8
    %v60 = vsel %vm59, %v53, 0.0
    %61 = vst [vmem:[#allocation5] sm:$0x1] %v60
    // Predicated region
    $region18: #{tpu_custom_call.1} parent=1 // pred_check
      _
    $region19: #{tpu_custom_call.1} parent=1 // pred_check_branch
      %63 = sbr.rel (0) target = $region21
    $region20: #{tpu_custom_call.1} parent=1 // pred_region
      %s65 = ssub.s32 16, 16
      %66 = vsyncadd [#allocation3], %s65
      %s68 = sshll.u32 [#allocation5], 4
      %s69 = int_to_ptr.vmem [resolvable:$true] %s68
      %71 = dma.vmem_to_hbm [thread:$0]  %s69, 16, %s3, [#allocation3]
    $region21: #{tpu_custom_call.1} parent=1 // pred_fallthru
      _
    // Predicated region
    $region22: #{tpu_custom_call.1} parent=1 // pred_check
      _
    $region23: #{tpu_custom_call.1} parent=1 // pred_check_branch
      %73 = sbr.rel (0) target = $region25
    $region24: #{tpu_custom_call.1} parent=1 // pred_region
      %74 = dma.done [#allocation3], 16
    $region25: #{tpu_custom_call.1} parent=1 // pred_fallthru
      _
    %75 = vsyncpa [#allocation3], 1
    %76 = vsyncpa [#allocation4], 1

</llo_original>
